<compile_context>
chip_gen: v5e
topology: v5e:2x2
jax: 0.10.0
libtpu: 0.0.40
codegen_flags: <defaults>
</compile_context>

<pallas_src>
import functools

import jax
import jax.numpy as jnp
from jax.experimental import pallas as pl
from jax.experimental.pallas import tpu as pltpu

_MiB = 1024 * 1024


def _fused_mlp_kernel(x_ref, w1_ref, b1_ref, w2_ref, b2_ref, o_ref, acc_ref,
                      *, gelu_approximate):
    k = pl.program_id(1)

    @pl.when(k == 0)
    def _init():
        acc_ref[...] = jnp.zeros_like(acc_ref)

    # In-kernel autocast of the activation tile (no-op when x is already in
    # the compute dtype) — avoids a separate full-array XLA cast pass.
    xv = x_ref[...].astype(w1_ref.dtype)

    # fc1 chunk on the MXU: (tm, n_in) @ (n_in, tk) -> f32
    h = jnp.dot(xv, w1_ref[...], preferred_element_type=jnp.float32)
    h = h + b1_ref[...]                              # f32 bias row, broadcast
    h = jax.nn.gelu(h, approximate=gelu_approximate)

    # fc2 partial product, accumulated into the f32 VMEM scratch accumulator.
    acc_ref[...] += jnp.dot(h.astype(w2_ref.dtype), w2_ref[...],
                            preferred_element_type=jnp.float32)

    @pl.when(k == pl.num_programs(1) - 1)
    def _finalize():
        o_ref[...] = (acc_ref[...] + b2_ref[...]).astype(o_ref.dtype)


def prepare_params(w1, b1, w2, b2, compute_dtype=jnp.bfloat16):
    """One-time conversion of PyTorch nn.Linear-layout params.

    w1: (inter, in), w2: (out, inter)  ->  (K, N) layout in compute dtype.
    Biases -> f32 (1, N) rows so no per-step cast is needed in the kernel.
    Do this at parameter-init time, not per forward call.
    """
    w1_kn = jnp.asarray(w1, compute_dtype).T            # (in, inter)
    w2_kn = jnp.asarray(w2, compute_dtype).T            # (inter, out)
    b1_r = jnp.asarray(b1, jnp.float32).reshape(1, -1)  # (1, inter)
    b2_r = jnp.asarray(b2, jnp.float32).reshape(1, -1)  # (1, out)
    return w1_kn, b1_r, w2_kn, b2_r


def _device_info():
    """Returns (physical VMEM bytes, #TensorCores sharing the grid)."""
    vmem_cap = 64 * _MiB          # conservative default (v7x per-TC VMEM)
    try:
        info = pltpu.get_tpu_info()
        vmem_cap = int(getattr(info, "vmem_capacity_bytes", vmem_cap))
    except Exception:
        pass
    num_tc = 1
    try:
        kind = jax.devices()[0].device_kind.lower()
        if "v7" in kind:
            num_tc = 2            # v7x: 2 TensorCores share the "parallel" axis
    except Exception:
        pass
    return vmem_cap, num_tc


def _vmem_estimate(tm, tk, n_in, n_out, x_bpe, w_bpe):
    return (2 * tm * n_in * x_bpe        # x tiles (double-buffered, input dtype)
            + 2 * n_in * tk * w_bpe      # W1 tiles
            + 2 * tk * 4                 # b1 chunk (f32)
            + 2 * tk * n_out * w_bpe     # W2 tiles
            + 2 * n_out * 4              # b2 (f32)
            + 2 * tm * n_out * w_bpe     # output tiles
            + tm * n_out * 4             # f32 accumulator scratch
            + tm * tk * (4 + w_bpe))     # GELU intermediate (f32 h + cast copy)


def _select_tiles(M, n_in, inter, n_out, x_bpe, w_bpe, budget, num_tc,
                  tm_hint=None, tk_hint=None):
    # --- row-tile (tm) candidates: biggest first, sublane/MXU aligned -------
    if M >= 16:
        m_cap = ((M + 15) // 16) * 16    # bf16 sublane packing
    else:
        m_cap = ((M + 7) // 8) * 8
    tm_cands = [t for t in (1024, 512, 256, 128, 64, 32, 16, 8) if t <= m_cap]
    if m_cap not in tm_cands:
        tm_cands = sorted(set(tm_cands + [m_cap]), reverse=True)
    if tm_hint is not None:
        tm_cands = [t for t in tm_cands if t <= tm_hint] or [tm_cands[-1]]

    # --- reduction-tile (tk) candidates --------------------------------------
    # First choice: tk == inter (single k step -> W1/W2 block indices constant
    # over the whole grid, so weights are DMA'd once and stay resident).
    # Otherwise: large multiples of 128 that divide inter exactly.
    tk_cands = [inter]
    start = (min(1024, inter) // 128) * 128
    for t in range(start, 127, -128):
        if t != inter and inter % t == 0:
            tk_cands.append(t)
    if tk_hint is not None:
        filt = [t for t in tk_cands if t <= tk_hint]
        tk_cands = filt or tk_cands

    # --- pick the largest (tm, tk) that fits the VMEM budget -----------------
    # Prefer shrinking tk over tm: tm sets arithmetic intensity vs. weight HBM
    # traffic; tk only sets per-step DMA granularity.
    chosen = None
    for tm_c in tm_cands:
        for tk_c in tk_cands:
            est = _vmem_estimate(tm_c, tk_c, n_in, n_out, x_bpe, w_bpe)
            if int(est * 1.15) <= budget:
                chosen = (tm_c, tk_c, est)
                break
        if chosen is not None:
            break
    if chosen is None:
        # Unavoidable fallback (e.g. inter has no 128-multiple divisor and is
        # itself huge): take the smallest legal combo.
        tm_c, tk_c = tm_cands[-1], tk_cands[-1]
        chosen = (tm_c, tk_c, _vmem_estimate(tm_c, tk_c, n_in, n_out, x_bpe, w_bpe))

    tm_sel, tk_sel, est = chosen

    # --- v7x megacore occupancy: ensure both TensorCores get row tiles -------
    if num_tc > 1 and pl.cdiv(M, tm_sel) < num_tc and M >= 32 * num_tc:
        tm_mc = ((pl.cdiv(M, num_tc) + 15) // 16) * 16
        if 16 <= tm_mc < tm_sel:
            tm_sel = tm_mc
            est = _vmem_estimate(tm_sel, tk_sel, n_in, n_out, x_bpe, w_bpe)

    return tm_sel, tk_sel, est


def fused_dense_gelu_dense(x, w1_kn, b1_r, w2_kn, b2_r, *, tm=None, tk=None,
                           compute_dtype=jnp.bfloat16, gelu_approximate=True):
    """x: [..., in_features]; w1_kn: (in, inter); b1_r: (1, inter) f32;
       w2_kn: (inter, out); b2_r: (1, out) f32.  Returns [..., out] in
       compute_dtype (bf16 stands in for the fp16 autocast of the module)."""
    batch_shape = x.shape[:-1]
    n_in = x.shape[-1]
    inter = w1_kn.shape[1]
    n_out = w2_kn.shape[1]
    assert w1_kn.shape[0] == n_in and w2_kn.shape[0] == inter

    # Keep x in its original dtype; the kernel casts each tile on the VPU.
    x2 = x.reshape(-1, n_in)
    M = x2.shape[0]

    vmem_cap, num_tc = _device_info()
    budget = max(vmem_cap - 8 * _MiB, 16 * _MiB)   # ~8 MiB physical headroom

    x_bpe = jnp.dtype(x2.dtype).itemsize
    w_bpe = jnp.dtype(w1_kn.dtype).itemsize
    tm_sel, tk_sel, vmem_est = _select_tiles(
        M, n_in, inter, n_out, x_bpe, w_bpe, budget, num_tc,
        tm_hint=tm, tk_hint=tk)

    grid = (pl.cdiv(M, tm_sel), inter // tk_sel)

    vmem_limit = int(max(32 * _MiB, min(budget, int(vmem_est * 1.3))))

    kernel = functools.partial(_fused_mlp_kernel,
                               gelu_approximate=gelu_approximate)

    out = pl.pallas_call(
        kernel,
        out_shape=jax.ShapeDtypeStruct((M, n_out), compute_dtype),
        grid_spec=pltpu.PrefetchScalarGridSpec(
            num_scalar_prefetch=0,
            grid=grid,
            in_specs=[
                pl.BlockSpec((tm_sel, n_in), lambda i, k: (i, 0)),    # x rows
                pl.BlockSpec((n_in, tk_sel), lambda i, k: (0, k)),    # W1 chunk
                pl.BlockSpec((1, tk_sel), lambda i, k: (0, k)),       # b1 chunk
                pl.BlockSpec((tk_sel, n_out), lambda i, k: (k, 0)),   # W2 chunk
                pl.BlockSpec((1, n_out), lambda i, k: (0, 0)),        # b2
            ],
            out_specs=pl.BlockSpec((tm_sel, n_out), lambda i, k: (i, 0)),
            scratch_shapes=[pltpu.VMEM((tm_sel, n_out), jnp.float32)],
        ),
        compiler_params=pltpu.CompilerParams(
            dimension_semantics=("parallel", "arbitrary"),
            vmem_limit_bytes=vmem_limit),
    )(x2, w1_kn, b1_r, w2_kn, b2_r)

    return out.reshape(*batch_shape, n_out)


# TODO(synk): backward pass (linear_gelu_linear_backward) and the
# checkpoint_activation recompute path are not implemented; forward only.


def _ref(x, w1, b1, w2, b2, gelu_approximate=True):
    # pure-JAX reference mirroring the kernel math (bf16 inputs, f32 accum).
    cdt = jnp.bfloat16
    xb = x.reshape(-1, x.shape[-1]).astype(cdt).astype(jnp.float32)
    h = xb @ jnp.asarray(w1, cdt).T.astype(jnp.float32) + jnp.asarray(b1, jnp.float32)
    h = jax.nn.gelu(h, approximate=gelu_approximate)
    o = (h.astype(cdt).astype(jnp.float32)
         @ jnp.asarray(w2, cdt).T.astype(jnp.float32)
         + jnp.asarray(b2, jnp.float32))
    return o.astype(cdt).reshape(*x.shape[:-1], w2.shape[0])


if __name__ == "__main__":
    # small shapes: batch=2, seq=8, in=32, intermediate=64, out=32
    batch, seq = 2, 8
    in_features, intermediate_features, out_features = 32, 64, 32

    key = jax.random.PRNGKey(0)
    kx, kw1, kb1, kw2, kb2 = jax.random.split(key, 5)

    x = jax.random.normal(kx, (batch, seq, in_features), jnp.float32)

    # deterministic nn.Linear-style init: U(-1/sqrt(fan_in), 1/sqrt(fan_in))
    lim1 = 1.0 / (in_features ** 0.5)
    w1 = jax.random.uniform(kw1, (intermediate_features, in_features),
                            jnp.float32, -lim1, lim1)
    b1 = jax.random.uniform(kb1, (intermediate_features,), jnp.float32, -lim1, lim1)
    lim2 = 1.0 / (intermediate_features ** 0.5)
    w2 = jax.random.uniform(kw2, (out_features, intermediate_features),
                            jnp.float32, -lim2, lim2)
    b2 = jax.random.uniform(kb2, (out_features,), jnp.float32, -lim2, lim2)

    # One-time parameter preparation (module-init time, not per call).
    w1_kn, b1_r, w2_kn, b2_r = prepare_params(w1, b1, w2, b2)

    out = fused_dense_gelu_dense(x, w1_kn, b1_r, w2_kn, b2_r)
    out = jax.block_until_ready(out)

    # exact-erf (module semantics) and kernel-math (tanh gelu) references
    ref_kernel_math = _ref(x, w1, b1, w2, b2, gelu_approximate=True)
    ref_module = _ref(x, w1, b1, w2, b2, gelu_approximate=False)

    assert out.shape == (batch, seq, out_features), out.shape
    assert jnp.allclose(out.astype(jnp.float32), ref_kernel_math.astype(jnp.float32),
                        atol=2e-2, rtol=2e-2)
    assert jnp.allclose(out.astype(jnp.float32), ref_module.astype(jnp.float32),
                        atol=3e-2, rtol=3e-2)

    print("KERNEL_OK")
</pallas_src>

<mosaic_0001>
module attributes {stable_mosaic.version = 11 : i64} {
  func.func @_fused_mlp_kernel(%arg0: i32, %arg1: i32, %arg2: memref<16x32xf32, #tpu.memory_space<vmem>>, %arg3: memref<32x64xbf16, #tpu.memory_space<vmem>>, %arg4: memref<1x64xf32, #tpu.memory_space<vmem>>, %arg5: memref<64x32xbf16, #tpu.memory_space<vmem>>, %arg6: memref<1x32xf32, #tpu.memory_space<vmem>>, %arg7: memref<16x32xbf16, #tpu.memory_space<vmem>>, %arg8: memref<16x32xf32, #tpu.memory_space<vmem>>) attributes {dimension_semantics = [#tpu.dimension_semantics<parallel>, #tpu.dimension_semantics<arbitrary>], iteration_bounds = array<i64: 1, 1>, scalar_prefetch = 0 : i64, scratch_operands = 1 : i64, tpu.core_type = #tpu.core_type<tc>, window_params = [{transform_indices = @transform_0, window_bounds = array<i64: 16, 32>}, {transform_indices = @transform_1, window_bounds = array<i64: 32, 64>}, {transform_indices = @transform_2, window_bounds = array<i64: 1, 64>}, {transform_indices = @transform_3, window_bounds = array<i64: 64, 32>}, {pipeline_mode = #tpu.pipeline_mode<synchronous>, transform_indices = @transform_4, window_bounds = array<i64: 1, 32>}, {transform_indices = @transform_5, window_bounds = array<i64: 16, 32>}]} {
    %c0_i32 = arith.constant 0 : i32
    %0 = arith.cmpi eq, %arg1, %c0_i32 : i32
    %1 = arith.extui %0 : i1 to i32
    %c0_i32_0 = arith.constant 0 : i32
    %2 = arith.cmpi ne, %1, %c0_i32_0 : i32
    scf.if %2 {
      %cst_19 = arith.constant 0.000000e+00 : f32
      %32 = vector.broadcast %cst_19 : f32 to vector<16x32xf32>
      %c0_20 = arith.constant 0 : index
      %c0_21 = arith.constant 0 : index
      %33 = vector.load %arg8[%c0_20, %c0_21] : memref<16x32xf32, #tpu.memory_space<vmem>>, vector<16x32xf32>
      tpu.vector_store %arg8[%c0_20, %c0_21], %32 {strides = array<i32>} : memref<16x32xf32, #tpu.memory_space<vmem>>, vector<16x32xf32>,
    } else {
    }
    %c0 = arith.constant 0 : index
    %c0_1 = arith.constant 0 : index
    %3 = vector.load %arg2[%c0, %c0_1] : memref<16x32xf32, #tpu.memory_space<vmem>>, vector<16x32xf32>
    %4 = arith.truncf %3 : vector<16x32xf32> to vector<16x32xbf16>
    %c0_2 = arith.constant 0 : index
    %c0_3 = arith.constant 0 : index
    %5 = vector.load %arg3[%c0_2, %c0_3] : memref<32x64xbf16, #tpu.memory_space<vmem>>, vector<32x64xbf16>
    %cst = arith.constant dense<0.000000e+00> : vector<16x64xf32>
    %6 = tpu.matmul %4, %5, %cst {dimension_numbers = #tpu.dot_dimension_numbers<[1], [0], [0], [1], [0, 0, 1, 1], [], []>} : vector<16x32xbf16>, vector<32x64xbf16>, vector<16x64xf32> -> vector<16x64xf32>
    %c0_4 = arith.constant 0 : index
    %c0_5 = arith.constant 0 : index
    %7 = vector.load %arg4[%c0_4, %c0_5] : memref<1x64xf32, #tpu.memory_space<vmem>>, vector<1x64xf32>
    %8 = vector.broadcast %7 : vector<1x64xf32> to vector<16x64xf32>
    %9 = arith.addf %6, %8 : vector<16x64xf32>
    %10 = arith.mulf %9, %9 : vector<16x64xf32>
    %11 = arith.mulf %9, %10 : vector<16x64xf32>
    %cst_6 = arith.constant 4.471500e-02 : f32
    %12 = vector.broadcast %cst_6 : f32 to vector<16x64xf32>
    %13 = arith.mulf %12, %11 : vector<16x64xf32>
    %14 = arith.addf %9, %13 : vector<16x64xf32>
    %cst_7 = arith.constant 0.797884583 : f32
    %15 = vector.broadcast %cst_7 : f32 to vector<16x64xf32>
    %16 = arith.mulf %15, %14 : vector<16x64xf32>
    %17 = math.tanh %16 : vector<16x64xf32>
    %cst_8 = arith.constant 1.000000e+00 : f32
    %18 = vector.broadcast %cst_8 : f32 to vector<16x64xf32>
    %19 = arith.addf %18, %17 : vector<16x64xf32>
    %cst_9 = arith.constant 5.000000e-01 : f32
    %20 = vector.broadcast %cst_9 : f32 to vector<16x64xf32>
    %21 = arith.mulf %20, %19 : vector<16x64xf32>
    %22 = arith.mulf %9, %21 : vector<16x64xf32>
    %c0_10 = arith.constant 0 : index
    %c0_11 = arith.constant 0 : index
    %23 = vector.load %arg8[%c0_10, %c0_11] : memref<16x32xf32, #tpu.memory_space<vmem>>, vector<16x32xf32>
    %24 = arith.truncf %22 : vector<16x64xf32> to vector<16x64xbf16>
    %c0_12 = arith.constant 0 : index
    %c0_13 = arith.constant 0 : index
    %25 = vector.load %arg5[%c0_12, %c0_13] : memref<64x32xbf16, #tpu.memory_space<vmem>>, vector<64x32xbf16>
    %cst_14 = arith.constant dense<0.000000e+00> : vector<16x32xf32>
    %26 = tpu.matmul %24, %25, %cst_14 {dimension_numbers = #tpu.dot_dimension_numbers<[1], [0], [0], [1], [0, 0, 1, 1], [], []>} : vector<16x64xbf16>, vector<64x32xbf16>, vector<16x32xf32> -> vector<16x32xf32>
    %27 = arith.addf %23, %26 : vector<16x32xf32>
    %c0_15 = arith.constant 0 : index
    %c0_16 = arith.constant 0 : index
    %28 = vector.load %arg8[%c0_15, %c0_16] : memref<16x32xf32, #tpu.memory_space<vmem>>, vector<16x32xf32>
    tpu.vector_store %arg8[%c0_15, %c0_16], %27 {strides = array<i32>} : memref<16x32xf32, #tpu.memory_space<vmem>>, vector<16x32xf32>,
    %c0_i32_17 = arith.constant 0 : i32
    %29 = arith.cmpi eq, %arg1, %c0_i32_17 : i32
    %30 = arith.extui %29 : i1 to i32
    %c0_i32_18 = arith.constant 0 : i32
    %31 = arith.cmpi ne, %30, %c0_i32_18 : i32
    scf.if %31 {
      %c0_19 = arith.constant 0 : index
      %c0_20 = arith.constant 0 : index
      %32 = vector.load %arg8[%c0_19, %c0_20] : memref<16x32xf32, #tpu.memory_space<vmem>>, vector<16x32xf32>
      %c0_21 = arith.constant 0 : index
      %c0_22 = arith.constant 0 : index
      %33 = vector.load %arg6[%c0_21, %c0_22] : memref<1x32xf32, #tpu.memory_space<vmem>>, vector<1x32xf32>
      %34 = vector.broadcast %33 : vector<1x32xf32> to vector<16x32xf32>
      %35 = arith.addf %32, %34 : vector<16x32xf32>
      %36 = arith.truncf %35 : vector<16x32xf32> to vector<16x32xbf16>
      %c0_23 = arith.constant 0 : index
      %c0_24 = arith.constant 0 : index
      %37 = vector.load %arg7[%c0_23, %c0_24] : memref<16x32xbf16, #tpu.memory_space<vmem>>, vector<16x32xbf16>
      tpu.vector_store %arg7[%c0_23, %c0_24], %36 {strides = array<i32>} : memref<16x32xbf16, #tpu.memory_space<vmem>>, vector<16x32xbf16>,
    } else {
    }
    return
  }
  func.func @transform_0(%arg0: i32, %arg1: i32) -> (i32, i32) {
    %c0_i32 = arith.constant 0 : i32
    %c0_i32_0 = arith.constant 0 : i32
    return %arg0, %c0_i32 : i32, i32
  }
  func.func @transform_1(%arg0: i32, %arg1: i32) -> (i32, i32) {
    %c0_i32 = arith.constant 0 : i32
    %c0_i32_0 = arith.constant 0 : i32
    return %c0_i32, %arg1 : i32, i32
  }
  func.func @transform_2(%arg0: i32, %arg1: i32) -> (i32, i32) {
    %c0_i32 = arith.constant 0 : i32
    %c0_i32_0 = arith.constant 0 : i32
    return %c0_i32, %arg1 : i32, i32
  }
  func.func @transform_3(%arg0: i32, %arg1: i32) -> (i32, i32) {
    %c0_i32 = arith.constant 0 : i32
    %c0_i32_0 = arith.constant 0 : i32
    return %arg1, %c0_i32 : i32, i32
  }
  func.func @transform_4(%arg0: i32, %arg1: i32) -> (i32, i32) {
    %c0_i32 = arith.constant 0 : i32
    %c0_i32_0 = arith.constant 0 : i32
    %c0_i32_1 = arith.constant 0 : i32
    return %c0_i32, %c0_i32_0 : i32, i32
  }
  func.func @transform_5(%arg0: i32, %arg1: i32) -> (i32, i32) {
    %c0_i32 = arith.constant 0 : i32
    %c0_i32_0 = arith.constant 0 : i32
    return %arg0, %c0_i32 : i32, i32
  }
}

</mosaic_0001>

<llo_original>
// kernel: tpu_custom_call.1
$region0: #{tpu_custom_call.1}
  #allocation0 [shape = 'u32[]', space=smem, size = 0x4, offset = 0x4, fixed_abs, tag = 'smem constant byte address 0x4 - core index']
  #allocation1 [shape = 'u32[72,128]{1,0:T(1,128)}', space=vmem, size = 0x9000, scoped, tag = 'internal scratch']
  #allocation2 [shape = 'f32[16,32]{1,0:T(8,128)}', space=vmem, size = 0x2000, scoped, tag = 'scratch operand']
  %s0 = inlined_call_operand.vmem [shape: f32[16,32], index: 0, kind: input, shape index: {}]
  %s1 = inlined_call_operand.vmem [shape: bf16[32,64], index: 1, kind: input, shape index: {}]
  %s2 = inlined_call_operand.vmem [shape: f32[1,64], index: 2, kind: input, shape index: {}]
  %s3 = inlined_call_operand.vmem [shape: bf16[64,32], index: 3, kind: input, shape index: {}]
  %s4 = inlined_call_operand.vmem [shape: f32[1,32], index: 4, kind: input, shape index: {}]
  %s5 = inlined_call_operand.hbm [shape: bf16[16,32], index: 5, kind: output, shape index: {}]
  %s6 = sld [smem:[#allocation0]]
  $region38: #{tpu_custom_call.1} parent=0
    _
  %s8 = ssub.s32 1, %s6
  %s9 = scalar_select 0, %s8, %s6
  $region1: #{tpu_custom_call.1} parent=0
    #allocation3 [shape = 'u8[4096]{0}', space=vmem, size = 0x1000, scoped, tag = 'output window, operand 0, single buffered']
    #allocation4 [shape = 's32[1]{0}', space=sflag, size = 0x4, scoped, tag = 'scoped memory for tpu_custom_call.1']
    %10 = vsyncpa [#allocation4], 0
    // Predicated region
    $region2: #{tpu_custom_call.1} parent=1 // pred_check
      _
    $region3: #{tpu_custom_call.1} parent=1 // pred_check_branch
      %12 = sbr.rel (0) target = $region5
    $region4: #{tpu_custom_call.1} parent=1 // pred_region
      _
    $region5: #{tpu_custom_call.1} parent=1 // pred_fallthru
      _
    // Predicated region
    $region6: #{tpu_custom_call.1} parent=1 // pred_check
      _
    $region7: #{tpu_custom_call.1} parent=1 // pred_check_branch
      %14 = sbr.rel (0) target = $region9
    $region8: #{tpu_custom_call.1} parent=1 // pred_region
      _
    $region9: #{tpu_custom_call.1} parent=1 // pred_fallthru
      _
    // Predicated region
    $region10: #{tpu_custom_call.1} parent=1 // pred_check
      _
    $region11: #{tpu_custom_call.1} parent=1 // pred_check_branch
      %16 = sbr.rel (0) target = $region13
    $region12: #{tpu_custom_call.1} parent=1 // pred_region
      _
    $region13: #{tpu_custom_call.1} parent=1 // pred_fallthru
      _
    // Predicated region
    $region14: #{tpu_custom_call.1} parent=1 // pred_check
      _
    $region15: #{tpu_custom_call.1} parent=1 // pred_check_branch
      %18 = sbr.rel (0) target = $region17
    $region16: #{tpu_custom_call.1} parent=1 // pred_region
      _
    $region17: #{tpu_custom_call.1} parent=1 // pred_fallthru
      _
    // Predicated region
    $region18: #{tpu_custom_call.1} parent=1 // pred_check
      _
    $region19: #{tpu_custom_call.1} parent=1 // pred_check_branch
      %20 = sbr.rel (0) target = $region21
    $region20: #{tpu_custom_call.1} parent=1 // pred_region
      _
    $region21: #{tpu_custom_call.1} parent=1 // pred_fallthru
      _
    %p22 = scmp.eq.s32.totalorder 0, 0
    // Predicated region
    $region22: #{tpu_custom_call.1} parent=1 // pred_check
      %p23 = pneg %p22
    $region23: #{tpu_custom_call.1} parent=1 // pred_check_branch
      %25 = sbr.rel (%p23) target = $region25
    $region24: #{tpu_custom_call.1} parent=1 // pred_region
      %vm26 = vcmask 261120
      %27 = vst.msk [vmem:[#allocation2] sm:$0xff] %vm26, 0.0
      %28 = vst.msk [vmem:[#allocation2 + $0x8] sm:$0xff] %vm26, 0.0
    $region25: #{tpu_custom_call.1} parent=1 // pred_fallthru
      _
    %v29 = vld [vmem:[%s0] sm:$0xff]
    %v30 = vld [vmem:[%s0 + $0x8] sm:$0xff]
    %v31 = vpack.c.bf16 %v30, %v29
    %v32 = vld [vmem:[%s1] sm:$0xf]
    %v33 = vld [vmem:[%s1 + $0x4] sm:$0xf]
    %v34 = vld [vmem:[%s1 + $0x8] sm:$0xf]
    %v35 = vld [vmem:[%s1 + $0xc] sm:$0xf]
    %v36 = vld [vmem:[%s2] sm:$0x1]
    %v38 = vperm.slane %v36, 0
    %v44 = vunpack.c.l.b16 %v32
    %v45 = vunpack.c.l.b16 %v33
    %v46 = vunpack.c.l.b16 %v34
    %v47 = vunpack.c.l.b16 %v35
    %v48 = vpack.c.b16 %v45, %v44
    %v49 = vpack.c.b16 %v47, %v46
    %vm52 = vcmask 261120
    %v54 = vsel %vm52, %v31, 0
    %56 = vmatpush.bf16.msra.mxu0 0
    %57 = vmatpush.bf16.msra.mxu0 0
    %58 = vmatpush.bf16.msra.mxu0 0
    %59 = vmatpush.bf16.msra.mxu0 0
    %60 = vmatpush.bf16.msra.mxu0 0
    %61 = vmatpush.bf16.msra.mxu0 0
    %62 = vmatpush.bf16.msra.mxu0 %v49
    %63 = vmatpush.bf16.msra.mxu0 %v48
    %64 = vmatmul.bf16.gmra.mxu0 %v54
    %v65 = vpop.f32.mrf.mxu0
    %v66 = vadd.f32 %v38, %v65
    %v67 = vpop.f32.mrf.mxu0
    %v68 = vadd.f32 %v38, %v67
    %69 = vdwg.mxu0
    %v70 = vmul.f32 %v66, %v66
    %v71 = vmul.f32 %v68, %v68
    %v72 = vmul.f32 %v66, %v70
    %v73 = vmul.f32 %v68, %v71
    %v74 = vmul.f32 %v72, 0.044715
    %v75 = vmul.f32 %v73, 0.044715
    %v76 = vadd.f32 %v66, %v74
    %v77 = vadd.f32 %v68, %v75
    %v78 = vmul.f32 %v76, 0.7978846
    %v79 = vmul.f32 %v77, 0.7978846
    %v80 = vtanh.pop %v78
    %v81 = vtanh.pop %v79
    %v82 = vadd.f32 %v80, 1.0
    %v83 = vadd.f32 %v81, 1.0
    %v84 = vmul.f32 %v82, 0.5
    %v85 = vmul.f32 %v83, 0.5
    %v86 = vmul.f32 %v66, %v84
    %v87 = vmul.f32 %v68, %v85
    %v88 = vld [vmem:[#allocation2] sm:$0xff]
    %v89 = vld [vmem:[#allocation2 + $0x8] sm:$0xff]
    %v90 = vpack.c.bf16 %v87, %v86
    %v91 = vld [vmem:[%s3] sm:$0xf]
    %v92 = vld [vmem:[%s3 + $0x4] sm:$0xf]
    %v93 = vld [vmem:[%s3 + $0x8] sm:$0xf]
    %v94 = vld [vmem:[%s3 + $0xc] sm:$0xf]
    %v95 = vld [vmem:[%s3 + $0x10] sm:$0xf]
    %v96 = vld [vmem:[%s3 + $0x14] sm:$0xf]
    %v97 = vld [vmem:[%s3 + $0x18] sm:$0xf]
    %v98 = vld [vmem:[%s3 + $0x1c] sm:$0xf]
    %v107 = vunpack.c.l.b16 %v91
    %v108 = vunpack.c.l.b16 %v92
    %v109 = vunpack.c.l.b16 %v93
    %v110 = vunpack.c.l.b16 %v94
    %v111 = vunpack.c.l.b16 %v95
    %v112 = vunpack.c.l.b16 %v96
    %v113 = vunpack.c.l.b16 %v97
    %v114 = vunpack.c.l.b16 %v98
    %v115 = vpack.c.b16 %v108, %v107
    %v116 = vpack.c.b16 %v110, %v109
    %v117 = vpack.c.b16 %v112, %v111
    %v118 = vpack.c.b16 %v114, %v113
    %vm123 = vcmask 523264
    %v125 = vsel %vm123, %v90, 0
    %127 = vmatpush.bf16.msra.mxu0 0
    %128 = vmatpush.bf16.msra.mxu0 0
    %129 = vmatpush.bf16.msra.mxu0 0
    %130 = vmatpush.bf16.msra.mxu0 0
    %131 = vmatpush.bf16.msra.mxu0 %v118
    %132 = vmatpush.bf16.msra.mxu0 %v117
    %133 = vmatpush.bf16.msra.mxu0 %v116
    %134 = vmatpush.bf16.msra.mxu0 %v115
    %135 = vmatmul.bf16.gmra.mxu0 %v125
    %v136 = vpop.f32.mrf.mxu0
    %v137 = vadd.f32 0.0, %v136
    %v138 = vpop.f32.mrf.mxu0
    %v139 = vadd.f32 0.0, %v138
    %140 = vdwg.mxu0
    %v141 = vadd.f32 %v88, %v137
    %v142 = vadd.f32 %v89, %v139
    %143 = vst.msk [vmem:[#allocation2] sm:$0xff] %vm52, %v141
    %144 = vst.msk [vmem:[#allocation2 + $0x8] sm:$0xff] %vm52, %v142
    // Predicated region
    $region26: #{tpu_custom_call.1} parent=1 // pred_check
      %p145 = pneg %p22
    $region27: #{tpu_custom_call.1} parent=1 // pred_check_branch
      %147 = sbr.rel (%p145) target = $region29
    $region28: #{tpu_custom_call.1} parent=1 // pred_region
      %v148 = vld [vmem:[#allocation2] sm:$0xff]
      %v149 = vld [vmem:[#allocation2 + $0x8] sm:$0xff]
      %v150 = vld [vmem:[%s4] sm:$0x1]
      %v152 = vperm.slane %v150, 0
      %v154 = vadd.f32 %v148, %v152
      %v155 = vadd.f32 %v149, %v152
      %v156 = vpack.c.bf16 %v154, %v154
      %v157 = vpack.c.bf16 %v155, %v155
      %vm158 = vcmask 257024
      %159 = vst.msk [vmem:[#allocation3] sm:$0xf] %vm158, %v156
      %160 = vst.msk [vmem:[#allocation3 + $0x4] sm:$0xf] %vm158, %v157
    $region29: #{tpu_custom_call.1} parent=1 // pred_fallthru
      _
    // Predicated region
    $region30: #{tpu_custom_call.1} parent=1 // pred_check
      _
    $region31: #{tpu_custom_call.1} parent=1 // pred_check_branch
      %162 = sbr.rel (0) target = $region33
    $region32: #{tpu_custom_call.1} parent=1 // pred_region
      %164 = vsyncadd [#allocation4], 0
      %s165 = sshll.u32 [#allocation3], 4
      %s166 = int_to_ptr.vmem [resolvable:$true] %s165
      %s167 = sshll.u32 %s5, 4
      %s168 = int_to_ptr.hbm [resolvable:$true] %s167
      %173 = dma.vmem_to_hbm [thread:$0]  %s166, 128, %s168, [#allocation4], 64, 64, 4
    $region33: #{tpu_custom_call.1} parent=1 // pred_fallthru
      _
    // Predicated region
    $region34: #{tpu_custom_call.1} parent=1 // pred_check
      _
    $region35: #{tpu_custom_call.1} parent=1 // pred_check_branch
      %175 = sbr.rel (0) target = $region37
    $region36: #{tpu_custom_call.1} parent=1 // pred_region
      %177 = dma.done [#allocation4], 128
    $region37: #{tpu_custom_call.1} parent=1 // pred_fallthru
      _
    %178 = vsyncpa [#allocation4], 1

</llo_original>
